<compile_context>
chip_gen: v5e
topology: v5e:2x2
jax: 0.10.0
libtpu: 0.0.40
codegen_flags: <defaults>
</compile_context>

<pallas_src>
import math

import jax
import jax.numpy as jnp
from jax.experimental import pallas as pl
from jax.experimental.pallas import tpu as pltpu

_LANES = 128
_TARGET_TILE_BYTES = 4 * 1024 * 1024    # per x/out tile, counted with VMEM padding
_VMEM_LIMIT_BYTES = 32 * 1024 * 1024


def _round_up(n: int, m: int) -> int:
    return -(-n // m) * m


def _sublanes(dtype) -> int:
    # Dtype-aware sublane packing: f32 -> 8, bf16/f16 -> 16, int8/fp8 -> 32.
    return max(8, 32 // jnp.dtype(dtype).itemsize)


def init_positional_encoding(d_model: int, max_len: int = 1000,
                             dtype=jnp.float32) -> jnp.ndarray:
    """Sinusoidal PE buffer, shape (max_len, 1, d_model) — mirrors the PyTorch buffer."""
    position = jnp.arange(max_len, dtype=jnp.float32)[:, None]            # (max_len, 1)
    div_term = jnp.exp(jnp.arange(0, d_model, 2, dtype=jnp.float32)
                       * (-math.log(10000.0) / d_model))                  # (ceil(D/2),)
    angles = position * div_term                                          # (max_len, ceil(D/2))
    pe = jnp.zeros((max_len, d_model), dtype=jnp.float32)
    pe = pe.at[:, 0::2].set(jnp.sin(angles))
    cos = jnp.cos(angles)
    if d_model % 2 == 1:
        cos = cos[:, : d_model // 2]
    pe = pe.at[:, 1::2].set(cos)
    return pe[:, None, :].astype(dtype)                                   # (max_len, 1, D)


def _pe_add_kernel(x_ref, pe_ref, o_ref):
    # x_ref: (tS, tB, D), pe_ref: (tS, 1, D) -> broadcasts along the batch
    # (sublane) dim.  One VPU add per loaded vreg; no reshapes/relayouts.
    o_ref[...] = x_ref[...] + pe_ref[...]


def positional_encoding_forward(x: jnp.ndarray, pe: jnp.ndarray) -> jnp.ndarray:
    """x: (S, B, D); pe: (max_len, 1, D) pre-cast to x.dtype.  Returns x + pe[:S]."""
    S, B, D = x.shape
    if pe.ndim != 3 or pe.shape[1] != 1 or pe.shape[2] != D:
        raise ValueError(f"pe must have shape (max_len, 1, {D}), got {pe.shape}")
    if S > pe.shape[0]:
        raise ValueError("sequence length exceeds max_len of the PE buffer")
    if pe.dtype != x.dtype:
        pe = pe.astype(x.dtype)   # no-op on the recommended (pre-cast at init) path

    itemsize = jnp.dtype(x.dtype).itemsize
    sub = _sublanes(x.dtype)
    d_pad = _round_up(D, _LANES)

    # --- batch tile: full B unless even a minimal (sub-row) block would blow the target ---
    padded_row_bytes = _round_up(B, sub) * d_pad * itemsize      # one s-row, VMEM-padded
    if B <= sub or sub * padded_row_bytes <= _TARGET_TILE_BYTES:
        t_b = B
    else:
        t_b = max(sub,
                  (_TARGET_TILE_BYTES // (sub * d_pad * itemsize)) // sub * sub)
    blk_row_bytes = _round_up(t_b, sub) * d_pad * itemsize

    # --- seq tile: as many rows as fit the target (tS is an outer block dim, so
    #     it has no sublane constraint), never more than S ---
    t_s = max(1, min(S, _TARGET_TILE_BYTES // blk_row_bytes))

    n_s = pl.cdiv(S, t_s)
    n_b = pl.cdiv(B, t_b)
    # v7x has 2 TensorCores: ensure the parallel grid has >= 2 steps to shard.
    if n_s * n_b < 2 and S >= 2:
        t_s = pl.cdiv(S, 2)
        n_s = pl.cdiv(S, t_s)

    n_elems = S * B * D
    cost = pl.CostEstimate(
        flops=n_elems,
        transcendentals=0,
        bytes_accessed=(2 * n_elems + S * D) * itemsize,
    )

    return pl.pallas_call(
        _pe_add_kernel,
        out_shape=jax.ShapeDtypeStruct((S, B, D), x.dtype),
        grid=(n_s, n_b),
        in_specs=[
            pl.BlockSpec((t_s, t_b, D), lambda i, b: (i, b, 0)),   # x
            pl.BlockSpec((t_s, 1, D), lambda i, b: (i, 0, 0)),     # pe (batch-invariant)
        ],
        out_specs=pl.BlockSpec((t_s, t_b, D), lambda i, b: (i, b, 0)),
        input_output_aliases={0: 0},   # write the result into x's (donated) buffer
        cost_estimate=cost,
        compiler_params=pltpu.CompilerParams(
            dimension_semantics=("parallel", "parallel"),
            vmem_limit_bytes=_VMEM_LIMIT_BYTES,
        ),
    )(x, pe)


if __name__ == "__main__":
    # Shapes consistent with the module's forward: x is (seq, batch, d_model).
    S, B, D = 16, 2, 32
    MAX_LEN = 1000

    key = jax.random.PRNGKey(0)
    x = jax.random.normal(key, (S, B, D), dtype=jnp.float32)
    pe = init_positional_encoding(D, MAX_LEN, dtype=x.dtype)  # buffer init (cast hoisted)

    # Reference (same formula as the PyTorch module), computed before x is donated.
    ref = jax.block_until_ready(x + pe[:S])

    fwd = jax.jit(positional_encoding_forward, donate_argnums=(0,))
    out = jax.block_until_ready(fwd(x, pe))

    assert out.shape == (S, B, D)
    assert jnp.allclose(out, ref, atol=1e-6), "mismatch vs reference"
    print("KERNEL_OK")
</pallas_src>

<mosaic_0001>
module attributes {stable_mosaic.version = 11 : i64} {
  func.func @_pe_add_kernel(%arg0: i32, %arg1: i32, %arg2: memref<8x2x32xf32, #tpu.memory_space<vmem>>, %arg3: memref<8x1x32xf32, #tpu.memory_space<vmem>>, %arg4: memref<8x2x32xf32, #tpu.memory_space<vmem>>) attributes {dimension_semantics = [#tpu.dimension_semantics<parallel>, #tpu.dimension_semantics<parallel>], iteration_bounds = array<i64: 2, 1>, scalar_prefetch = 0 : i64, scratch_operands = 0 : i64, tpu.core_type = #tpu.core_type<tc>, window_params = [{transform_indices = @transform_0, window_bounds = array<i64: 8, 2, 32>}, {transform_indices = @transform_1, window_bounds = array<i64: 8, 1, 32>}, {transform_indices = @transform_2, window_bounds = array<i64: 8, 2, 32>}]} {
    %c0 = arith.constant 0 : index
    %c0_0 = arith.constant 0 : index
    %c0_1 = arith.constant 0 : index
    %0 = vector.load %arg2[%c0, %c0_0, %c0_1] : memref<8x2x32xf32, #tpu.memory_space<vmem>>, vector<8x2x32xf32>
    %c0_2 = arith.constant 0 : index
    %c0_3 = arith.constant 0 : index
    %c0_4 = arith.constant 0 : index
    %1 = vector.load %arg3[%c0_2, %c0_3, %c0_4] : memref<8x1x32xf32, #tpu.memory_space<vmem>>, vector<8x1x32xf32>
    %2 = vector.broadcast %1 : vector<8x1x32xf32> to vector<8x2x32xf32>
    %3 = arith.addf %0, %2 : vector<8x2x32xf32>
    %c0_5 = arith.constant 0 : index
    %c0_6 = arith.constant 0 : index
    %c0_7 = arith.constant 0 : index
    %4 = vector.load %arg4[%c0_5, %c0_6, %c0_7] : memref<8x2x32xf32, #tpu.memory_space<vmem>>, vector<8x2x32xf32>
    tpu.vector_store %arg4[%c0_5, %c0_6, %c0_7], %3 {strides = array<i32>} : memref<8x2x32xf32, #tpu.memory_space<vmem>>, vector<8x2x32xf32>,
    return
  }
  func.func @transform_0(%arg0: i32, %arg1: i32) -> (i32, i32, i32) {
    %c0_i32 = arith.constant 0 : i32
    %c0_i32_0 = arith.constant 0 : i32
    return %arg0, %arg1, %c0_i32 : i32, i32, i32
  }
  func.func @transform_1(%arg0: i32, %arg1: i32) -> (i32, i32, i32) {
    %c0_i32 = arith.constant 0 : i32
    %c0_i32_0 = arith.constant 0 : i32
    %c0_i32_1 = arith.constant 0 : i32
    return %arg0, %c0_i32, %c0_i32_0 : i32, i32, i32
  }
  func.func @transform_2(%arg0: i32, %arg1: i32) -> (i32, i32, i32) {
    %c0_i32 = arith.constant 0 : i32
    %c0_i32_0 = arith.constant 0 : i32
    return %arg0, %arg1, %c0_i32 : i32, i32, i32
  }
}

</mosaic_0001>

<llo_original>
// kernel: positional_encoding_forward.1
$region0: #{positional_encoding_forward.1}
  #allocation0 [shape = 'u32[]', space=smem, size = 0x4, offset = 0x4, fixed_abs, tag = 'smem constant byte address 0x4 - core index']
  #allocation1 [shape = 'u32[72,128]{1,0:T(1,128)}', space=vmem, size = 0x9000, scoped, tag = 'internal scratch']
  %s0 = inlined_call_operand.hbm [shape: f32[16,2,32], index: 0, kind: input, shape index: {}, may-alias: {0,2}]
  %s1 = inlined_call_operand.vmem [shape: f32[1000,1,32], index: 1, kind: input, shape index: {}]
  %s2 = inlined_call_operand.hbm [shape: f32[16,2,32], index: 2, kind: output, shape index: {}, may-alias: {0,2}]
  %s3 = sld [smem:[#allocation0]]
  $region45: #{positional_encoding_forward.1} parent=0
    _
  %s5 = ssub.s32 1, %s3
  %s6 = scalar_select 0, %s5, %s3
  $region1: #{positional_encoding_forward.1} parent=0
    #allocation2 [shape = 'u8[16384]{0}', space=vmem, size = 0x4000, scoped, tag = 'input window, operand 0']
    #allocation3 [shape = 's32[2]{0}', space=sflag, size = 0x8, scoped, tag = 'scoped memory for positional_encoding_forward.1']
    #allocation4 [shape = 's32[2]{0}', space=sflag, size = 0x8, scoped, tag = 'scoped memory for positional_encoding_forward.1']
    #allocation5 [shape = 'u8[16384]{0}', space=vmem, size = 0x4000, scoped, tag = 'output window, operand 0']
    %7 = vsyncpa [#allocation3], 0
    %s8 = scalar_lea.sflag [#allocation3], 1
    %9 = vsyncpa %s8, 0
    %10 = vsyncpa [#allocation4], 0
    %s11 = scalar_lea.sflag [#allocation4], 1
    %12 = vsyncpa %s11, 0
    loop: start=0, step=1, limit=4
    $region2: #{positional_encoding_forward.1} parent=1 // loop_pre_header
      _
    $region3: #{positional_encoding_forward.1} parent=1 // loop_header
      %s14 = sphi 0, %s18
      %p15 = scmp.ge.s32.totalorder %s14, 4
      %s21 = sphi 0, %s33
      %s22 = sphi 0, %s29
      %s23 = sphi 0, %s21
      %s24 = sphi 0, %s22
      %s25 = sphi 0, %s23
      %s26 = sphi 0, %s24
      %s38 = sphi 0, %s40
      %s41 = sphi 0, %s38
      %s42 = sphi 0, %s41
      %s58 = sphi 0, %s42
      %s64 = sphi 0, %s66
      %s67 = sphi 0, %s64
      %s68 = sphi 0, %s67
      %s84 = sphi 0, %s68
      %s92 = sphi 0, %s94
      %s95 = sphi 0, %s92
      %s96 = sphi 0, %s95
      %s112 = sphi 0, %s96
    $region4: #{positional_encoding_forward.1} parent=1 // loop_header_branch
      %17 = sbr.rel (%p15) target = $region8
    $region5: #{positional_encoding_forward.1} parent=1 // loop_body
      %s19 = ssub.s32 %s14, 1
      %s20 = ssub.s32 %s14, 2
      %s27 = sadd.s32 1, %s22
      %p28 = scmp.ge.s32.totalorder %s27, 1
      %s29 = scalar_select %p28, 0, %s27
      %s30 = sadd.s32 1, %s21
      %s31 = scalar_select %p28, %s30, %s21
      %p32 = scmp.ge.s32.totalorder %s31, 2
      %s33 = scalar_select %p32, 0, %s31
      %s34 = ssub.s32 %s21, %s33
      %s35 = ssub.s32 %s22, %s29
      %s36 = sor.u32 %s34, %s35
      %p37 = scmp.eq.s32.totalorder %s36, 0
      %s39 = sadd.s32 %s38, 1
      %s40 = scalar_select %p37, %s38, %s39
      %p43 = pneg %p37
      %p44 = scmp.eq.s32.totalorder %s14, 1
      %p45 = por %p43, %p44
      %p46 = scmp.ne.s32.totalorder %s38, %s41
      %p47 = scmp.eq.s32.totalorder %s14, 0
      %p48 = por %p46, %p47
      %p49 = scmp.ne.s32.totalorder %s38, %s41
      %p50 = scmp.eq.s32.totalorder %s19, 1
      %p51 = por %p49, %p50
      %p52 = scmp.ne.s32.totalorder %s41, %s42
      %p53 = scmp.eq.s32.totalorder %s19, 0
      %p54 = por %p52, %p53
      %p55 = scmp.ne.s32.totalorder %s41, %s42
      %p56 = scmp.eq.s32.totalorder %s20, 1
      %p57 = por %p55, %p56
      %p59 = scmp.ne.s32.totalorder %s42, %s58
      %p60 = scmp.eq.s32.totalorder %s20, 0
      %p61 = por %p59, %p60
      %s62 = ssub.s32 %s21, %s33
      %p63 = scmp.eq.s32.totalorder %s62, 0
      %s65 = sadd.s32 %s64, 1
      %s66 = scalar_select %p63, %s64, %s65
      %p69 = pneg %p63
      %p70 = scmp.eq.s32.totalorder %s14, 1
      %p71 = por %p69, %p70
      %p72 = scmp.ne.s32.totalorder %s64, %s67
      %p73 = scmp.eq.s32.totalorder %s14, 0
      %p74 = por %p72, %p73
      %p75 = scmp.ne.s32.totalorder %s64, %s67
      %p76 = scmp.eq.s32.totalorder %s19, 1
      %p77 = por %p75, %p76
      %p78 = scmp.ne.s32.totalorder %s67, %s68
      %p79 = scmp.eq.s32.totalorder %s19, 0
      %p80 = por %p78, %p79
      %p81 = scmp.ne.s32.totalorder %s67, %s68
      %p82 = scmp.eq.s32.totalorder %s20, 1
      %p83 = por %p81, %p82
      %p85 = scmp.ne.s32.totalorder %s68, %s84
      %p86 = scmp.eq.s32.totalorder %s20, 0
      %p87 = por %p85, %p86
      %s88 = ssub.s32 %s21, %s33
      %s89 = ssub.s32 %s22, %s29
      %s90 = sor.u32 %s88, %s89
      %p91 = scmp.eq.s32.totalorder %s90, 0
      %s93 = sadd.s32 %s92, 1
      %s94 = scalar_select %p91, %s92, %s93
      %p97 = pneg %p91
      %p98 = scmp.eq.s32.totalorder %s14, 1
      %p99 = por %p97, %p98
      %p100 = scmp.ne.s32.totalorder %s92, %s95
      %p101 = scmp.eq.s32.totalorder %s14, 0
      %p102 = por %p100, %p101
      %p103 = scmp.ne.s32.totalorder %s92, %s95
      %p104 = scmp.eq.s32.totalorder %s19, 1
      %p105 = por %p103, %p104
      %p106 = scmp.ne.s32.totalorder %s95, %s96
      %p107 = scmp.eq.s32.totalorder %s19, 0
      %p108 = por %p106, %p107
      %p109 = scmp.ne.s32.totalorder %s95, %s96
      %p110 = scmp.eq.s32.totalorder %s20, 1
      %p111 = por %p109, %p110
      %p113 = scmp.ne.s32.totalorder %s96, %s112
      %p114 = scmp.eq.s32.totalorder %s20, 0
      %p115 = por %p113, %p114
      %p116 = scmp.le.s32.totalorder 1, %s14
      %p117 = scmp.lt.s32.totalorder %s14, 3
      %p118 = pnand %p116, %p117
      %p119 = pneg %p118
      // Predicated region
      $region9: #{positional_encoding_forward.1} parent=5 // pred_check
        _
      $region10: #{positional_encoding_forward.1} parent=5 // pred_check_branch
        %121 = sbr.rel (%p118) target = $region12
      $region11: #{positional_encoding_forward.1} parent=5 // pred_region
        %s122 = ssub.s32 %s14, 1
      $region12: #{positional_encoding_forward.1} parent=5 // pred_fallthru
        _
      %p123 = scmp.lt.s32.totalorder %s14, 2
      // Predicated region
      $region13: #{positional_encoding_forward.1} parent=5 // pred_check
        %p124 = pneg %p123
      $region14: #{positional_encoding_forward.1} parent=5 // pred_check_branch
        %126 = sbr.rel (%p124) target = $region16
      $region15: #{positional_encoding_forward.1} parent=5 // pred_region
        // Predicated region
        $region17: #{positional_encoding_forward.1} parent=15 // pred_check
          %p127 = pneg %p48
        $region18: #{positional_encoding_forward.1} parent=15 // pred_check_branch
          %129 = sbr.rel (%p127) target = $region20
        $region19: #{positional_encoding_forward.1} parent=15 // pred_region
          %s130 = sand.u32 %s38, 1
          %s131 = scalar_lea.sflag [#allocation3], %s130
          %s132 = sand.u32 %s38, 1
          %s133 = smul.addr %s132, 16
          %s134 = scalar_lea.vmem [#allocation2], %s133
          %s135 = smul.u32 8, %s21
          %137 = vsyncadd %s131, 0
          %s138 = sadd.s32 %s22, %s135
          %s139 = smul.addr %s138, 2
          %s140 = scalar_lea.hbm %s0, %s139
          %s141 = sshll.u32 %s140, 4
          %s142 = int_to_ptr.hbm [resolvable:$true] %s141
          %s143 = sshll.u32 %s134, 4
          %s144 = int_to_ptr.vmem [resolvable:$true] %s143
          %149 = dma.hbm_to_vmem [thread:$0]  %s142, 256, %s144, %s131, 32, 32, 2
        $region20: #{positional_encoding_forward.1} parent=15 // pred_fallthru
          _
        // Predicated region
        $region21: #{positional_encoding_forward.1} parent=15 // pred_check
          %p150 = pneg %p74
        $region22: #{positional_encoding_forward.1} parent=15 // pred_check_branch
          %152 = sbr.rel (%p150) target = $region24
        $region23: #{positional_encoding_forward.1} parent=15 // pred_region
          %s153 = smul.u32 8, %s21
          %p154 = scmp.lt.s32.totalorder %s153, 999
          %s155 = scalar_select %p154, %s153, 999
          %s156 = scalar_lea.vmem %s1, %s155
          %s157 = smul.u32 8, %s21
        $region24: #{positional_encoding_forward.1} parent=15 // pred_fallthru
          _
      $region16: #{positional_encoding_forward.1} parent=5 // pred_fallthru
        _
      %p158 = scmp.le.s32.totalorder 1, %s14
      %p159 = scmp.lt.s32.totalorder %s14, 3
      %p160 = pnand %p158, %p159
      %p161 = pneg %p160
      // Predicated region
      $region25: #{positional_encoding_forward.1} parent=5 // pred_check
        _
      $region26: #{positional_encoding_forward.1} parent=5 // pred_check_branch
        %163 = sbr.rel (%p160) target = $region28
      $region27: #{positional_encoding_forward.1} parent=5 // pred_region
        %s164 = ssub.s32 %s14, 1
        %s165 = sand.u32 %s41, 1
        %s166 = scalar_lea.sflag [#allocation3], %s165
        %s167 = sand.u32 %s41, 1
        %s168 = smul.addr %s167, 16
        %s169 = scalar_lea.vmem [#allocation2], %s168
        // Predicated region
        $region29: #{positional_encoding_forward.1} parent=27 // pred_check
          %p170 = pneg %p54
        $region30: #{positional_encoding_forward.1} parent=27 // pred_check_branch
          %172 = sbr.rel (%p170) target = $region32
        $region31: #{positional_encoding_forward.1} parent=27 // pred_region
          %174 = dma.done %s166, 256
        $region32: #{positional_encoding_forward.1} parent=27 // pred_fallthru
          _
        %s175 = sand.u32 %s41, 1
        %s176 = scalar_lea.sflag [#allocation3], %s175
        %s177 = sand.u32 %s41, 1
        %s178 = smul.addr %s177, 16
        %s179 = scalar_lea.vmem [#allocation2], %s178
        %p180 = pneg %p54
        %p181 = pneg %p51
        %s182 = smul.u32 8, %s23
        %p183 = scmp.lt.s32.totalorder %s182, 999
        %s184 = scalar_select %p183, %s182, 999
        %s185 = scalar_lea.vmem %s1, %s184
        %p186 = pneg %p80
        %p187 = pneg %p77
        %p188 = pneg %p108
        %p189 = pneg %p105
        %s190 = sand.u32 %s95, 1
        %s191 = scalar_lea.sflag [#allocation4], %s190
        %s192 = sand.u32 %s95, 1
        %s193 = smul.addr %s192, 16
        %s194 = scalar_lea.vmem [#allocation5], %s193
        %s195 = smul.u32 8, %s23
        %s196 = smul.u32 8, %s23
        %p197 = scmp.lt.s32.totalorder %s196, 999
        %s198 = scalar_select %p197, %s196, 999
        %s199 = scalar_lea.vmem %s1, %s198
        %s200 = smul.u32 8, %s23
        %s201 = smul.u32 8, %s23
        %v202 = vld [vmem:[%s169] sm:$0x3]
        %v203 = vld [vmem:[%s169 + $0x2] sm:$0x3]
        %v204 = vld [vmem:[%s169 + $0x4] sm:$0x3]
        %v205 = vld [vmem:[%s169 + $0x6] sm:$0x3]
        %v206 = vld [vmem:[%s169 + $0x8] sm:$0x3]
        %v207 = vld [vmem:[%s169 + $0xa] sm:$0x3]
        %v208 = vld [vmem:[%s169 + $0xc] sm:$0x3]
        %v209 = vld [vmem:[%s169 + $0xe] sm:$0x3]
        %v210 = vld [vmem:[%s199] sm:$0x1]
        %v211 = vld [vmem:[%s199 + $0x1] sm:$0x1]
        %v212 = vld [vmem:[%s199 + $0x2] sm:$0x1]
        %v213 = vld [vmem:[%s199 + $0x3] sm:$0x1]
        %v214 = vld [vmem:[%s199 + $0x4] sm:$0x1]
        %v215 = vld [vmem:[%s199 + $0x5] sm:$0x1]
        %v216 = vld [vmem:[%s199 + $0x6] sm:$0x1]
        %v217 = vld [vmem:[%s199 + $0x7] sm:$0x1]
        %v226 = vperm.slane %v210, 0
        %v227 = vperm.slane %v211, 0
        %v228 = vperm.slane %v212, 0
        %v229 = vperm.slane %v213, 0
        %v230 = vperm.slane %v214, 0
        %v231 = vperm.slane %v215, 0
        %v232 = vperm.slane %v216, 0
        %v233 = vperm.slane %v217, 0
        %v242 = vadd.f32 %v202, %v226
        %v243 = vadd.f32 %v203, %v227
        %v244 = vadd.f32 %v204, %v228
        %v245 = vadd.f32 %v205, %v229
        %v246 = vadd.f32 %v206, %v230
        %v247 = vadd.f32 %v207, %v231
        %v248 = vadd.f32 %v208, %v232
        %v249 = vadd.f32 %v209, %v233
        %vm250 = vcmask 254976
        %251 = vst.msk [vmem:[%s194] sm:$0x3] %vm250, %v242
        %252 = vst.msk [vmem:[%s194 + $0x2] sm:$0x3] %vm250, %v243
        %253 = vst.msk [vmem:[%s194 + $0x4] sm:$0x3] %vm250, %v244
        %254 = vst.msk [vmem:[%s194 + $0x6] sm:$0x3] %vm250, %v245
        %255 = vst.msk [vmem:[%s194 + $0x8] sm:$0x3] %vm250, %v246
        %256 = vst.msk [vmem:[%s194 + $0xa] sm:$0x3] %vm250, %v247
        %257 = vst.msk [vmem:[%s194 + $0xc] sm:$0x3] %vm250, %v248
        %258 = vst.msk [vmem:[%s194 + $0xe] sm:$0x3] %vm250, %v249
        %s259 = sand.u32 %s95, 1
        %s260 = scalar_lea.sflag [#allocation4], %s259
        %s261 = sand.u32 %s95, 1
        %s262 = smul.addr %s261, 16
        %s263 = scalar_lea.vmem [#allocation5], %s262
        // Predicated region
        $region33: #{positional_encoding_forward.1} parent=27 // pred_check
          %p264 = pneg %p105
        $region34: #{positional_encoding_forward.1} parent=27 // pred_check_branch
          %266 = sbr.rel (%p264) target = $region36
        $region35: #{positional_encoding_forward.1} parent=27 // pred_region
          %s267 = smul.u32 8, %s23
          %269 = vsyncadd %s260, 0
          %s270 = sadd.s32 %s24, %s267
          %s271 = smul.addr %s270, 2
          %s272 = scalar_lea.hbm %s2, %s271
          %s273 = sshll.u32 %s263, 4
          %s274 = int_to_ptr.vmem [resolvable:$true] %s273
          %s275 = sshll.u32 %s272, 4
          %s276 = int_to_ptr.hbm [resolvable:$true] %s275
          %281 = dma.vmem_to_hbm [thread:$0]  %s274, 256, %s276, %s260, 32, 32, 2
        $region36: #{positional_encoding_forward.1} parent=27 // pred_fallthru
          _
      $region28: #{positional_encoding_forward.1} parent=5 // pred_fallthru
        _
      %p282 = scmp.le.s32.totalorder 2, %s14
      // Predicated region
      $region37: #{positional_encoding_forward.1} parent=5 // pred_check
        %p283 = pneg %p282
      $region38: #{positional_encoding_forward.1} parent=5 // pred_check_branch
        %285 = sbr.rel (%p283) target = $region40
      $region39: #{positional_encoding_forward.1} parent=5 // pred_region
        %s286 = ssub.s32 %s14, 2
        // Predicated region
        $region41: #{positional_encoding_forward.1} parent=39 // pred_check
          %p287 = pneg %p111
        $region42: #{positional_encoding_forward.1} parent=39 // pred_check_branch
          %289 = sbr.rel (%p287) target = $region44
        $region43: #{positional_encoding_forward.1} parent=39 // pred_region
          %s290 = sand.u32 %s96, 1
          %s291 = scalar_lea.sflag [#allocation4], %s290
          %s292 = sand.u32 %s96, 1
          %s293 = smul.addr %s292, 16
          %s294 = scalar_lea.vmem [#allocation5], %s293
          %296 = dma.done %s291, 256
        $region44: #{positional_encoding_forward.1} parent=39 // pred_fallthru
          _
      $region40: #{positional_encoding_forward.1} parent=5 // pred_fallthru
        _
    $region6: #{positional_encoding_forward.1} parent=1 // loop_footer
      %s18 = sadd.s32 1, %s14
    $region7: #{positional_encoding_forward.1} parent=1 // loop_footer_branch
      %13 = sbr.rel target = $region3
    $region8: #{positional_encoding_forward.1} parent=1 // loop_exit
      _
    %297 = vsyncpa [#allocation3], 1
    %s298 = scalar_lea.sflag [#allocation3], 1
    %299 = vsyncpa %s298, 1
    %300 = vsyncpa [#allocation4], 1
    %s301 = scalar_lea.sflag [#allocation4], 1
    %302 = vsyncpa %s301, 1

</llo_original>
